<compile_context>
chip_gen: v7x
topology: tpu7x:2x2x1
jax: 0.10.0
libtpu: 0.0.40
codegen_flags: <defaults>
</compile_context>

<pallas_src>
import jax
import jax.numpy as jnp
import numpy as np
from jax.experimental import pallas as pl
from jax.experimental.pallas import tpu as pltpu

# Small shapes consistent with the module.
N_NODES = 16
NUM_REL = 4
IN_FEATS = 8
OUT_FEATS = 16
N_EXTRA_EDGES = 32   # on top of a ring, so every node has in-degree >= 1

_SUB = 8      # TPU sublane multiple
_LANE = 128   # TPU lane multiple


def _round_up(x, m):
    return (x + m - 1) // m * m


def _pad2d(x, rows, cols):
    r, c = x.shape
    return jnp.pad(x, ((0, rows - r), (0, cols - c)))


def _gcn_kernel(adj_ref,    # (Np, Kp)    [A | R], zero padded
                feat_ref,   # (Kp, Fip)   [h ; rel_weight], zero padded
                w_t_ref,    # (Fip, Fop)  linear weight transposed, zero padded
                b_ref,      # (1, Fop)    linear bias, zero padded
                out_ref):   # (Np, Fop)   lane-dense output slab
    # message + sum-reduce over incoming edges: one fused MXU matmul.
    h_sum = jnp.dot(adj_ref[...], feat_ref[...],
                    preferred_element_type=jnp.float32)
    # NodeApplyModule: Linear + ReLU activation.
    out = jnp.dot(h_sum, w_t_ref[...],
                  preferred_element_type=jnp.float32) + b_ref[...]
    out_ref[...] = jnp.maximum(out, 0.0)


def gcn_forward(src, dst, rel, feature, params):
    """src/dst/rel: int32 (E,) edge lists; feature: (N, in_feats) node feats.
    Returns (N, out_feats) matching the PyTorch GCN forward (ReLU activation)."""
    N, Fin = feature.shape
    rel_w = params["rel_weight"]                                # (num_rel, Fin)
    R = rel_w.shape[0]
    Fout = params["w_lin"].shape[0]

    # Graph -> dense incoming-edge count matrices (host/XLA-side preprocessing).
    A = jnp.zeros((N, N), jnp.float32).at[dst, src].add(1.0)    # A[v,u] = #(u->v)
    Rm = jnp.zeros((N, R), jnp.float32).at[dst, rel].add(1.0)   # Rm[v,r]

    adj = jnp.concatenate([A, Rm], axis=1)                      # (N, N+R)
    feat_cat = jnp.concatenate([feature, rel_w], axis=0)        # (N+R, Fin)
    w_t = params["w_lin"].T                                     # (Fin, Fout)
    b = params["b_lin"].reshape(1, Fout)

    # Pad everything to (8, 128)-aligned tiles -> unmasked loads/stores.
    Np = _round_up(N, _SUB)
    Kp = _round_up(N + R, _LANE)
    Fip = _round_up(Fin, _LANE)
    Fop = _round_up(Fout, _LANE)

    adj_p = _pad2d(adj, Np, Kp)
    feat_p = _pad2d(feat_cat, Kp, Fip)
    w_t_p = _pad2d(w_t, Fip, Fop)
    b_p = _pad2d(b, 1, Fop)

    full = lambda shape: pl.BlockSpec(shape, lambda i: (0,) * len(shape))

    out_p = pl.pallas_call(
        _gcn_kernel,
        out_shape=jax.ShapeDtypeStruct((Np, Fop), jnp.float32),
        grid=(1,),
        in_specs=[full(adj_p.shape), full(feat_p.shape),
                  full(w_t_p.shape), full(b_p.shape)],
        out_specs=full((Np, Fop)),
        compiler_params=pltpu.CompilerParams(
            dimension_semantics=("arbitrary",)),
    )(adj_p, feat_p, w_t_p, b_p)

    # Strip the zero padding added for lane/sublane alignment.
    return out_p[:N, :Fout]


def _reference_forward(src, dst, rel, feature, params):
    """Pure-JAX edge-list reference mirroring the PyTorch/DGL module."""
    msgs = params["rel_weight"][rel] + feature[src]             # (E, Fin)
    h_sum = jnp.zeros_like(feature).at[dst].add(msgs)           # (N, Fin)
    out = h_sum @ params["w_lin"].T + params["b_lin"]           # (N, Fout)
    return jnp.maximum(out, 0.0)                                # ReLU


def make_params(key):
    """Parameter shapes matching the PyTorch module."""
    ks = jax.random.split(key, 3)
    k = 1.0 / np.sqrt(IN_FEATS)
    return {
        "rel_weight": jax.random.normal(ks[0], (NUM_REL, IN_FEATS), jnp.float32),
        "w_lin": jax.random.uniform(ks[1], (OUT_FEATS, IN_FEATS),
                                    jnp.float32, -k, k),
        "b_lin": jax.random.uniform(ks[2], (OUT_FEATS,), jnp.float32, -k, k),
    }


def make_graph(key):
    """Ring (guarantees in-degree >= 1) plus random extra typed edges."""
    ks = jax.random.split(key, 3)
    ring_src = jnp.arange(N_NODES, dtype=jnp.int32)
    ring_dst = (ring_src + 1) % N_NODES
    ex_src = jax.random.randint(ks[0], (N_EXTRA_EDGES,), 0, N_NODES, jnp.int32)
    ex_dst = jax.random.randint(ks[1], (N_EXTRA_EDGES,), 0, N_NODES, jnp.int32)
    src = jnp.concatenate([ring_src, ex_src])
    dst = jnp.concatenate([ring_dst, ex_dst])
    rel = jax.random.randint(ks[2], (src.shape[0],), 0, NUM_REL, jnp.int32)
    return src, dst, rel


if __name__ == "__main__":
    key = jax.random.PRNGKey(0)
    kp, kg, kf = jax.random.split(key, 3)

    params = make_params(kp)
    src, dst, rel = make_graph(kg)
    feature = jax.random.normal(kf, (N_NODES, IN_FEATS), jnp.float32)

    out = gcn_forward(src, dst, rel, feature, params)
    jax.block_until_ready(out)

    ref = _reference_forward(src, dst, rel, feature, params)
    np.testing.assert_allclose(np.asarray(out), np.asarray(ref),
                               rtol=1e-5, atol=1e-5)

    print("KERNEL_OK")
</pallas_src>

<mosaic_0001>
module attributes {stable_mosaic.version = 11 : i64} {
  func.func @_gcn_kernel(%arg0: i32, %arg1: memref<16x128xf32, #tpu.memory_space<vmem>>, %arg2: memref<128x128xf32, #tpu.memory_space<vmem>>, %arg3: memref<128x128xf32, #tpu.memory_space<vmem>>, %arg4: memref<1x128xf32, #tpu.memory_space<vmem>>, %arg5: memref<16x128xf32, #tpu.memory_space<vmem>>) attributes {dimension_semantics = [#tpu.dimension_semantics<arbitrary>], iteration_bounds = array<i64: 1>, scalar_prefetch = 0 : i64, scratch_operands = 0 : i64, tpu.core_type = #tpu.core_type<tc>, window_params = [{pipeline_mode = #tpu.pipeline_mode<synchronous>, transform_indices = @transform_0, window_bounds = array<i64: 16, 128>}, {pipeline_mode = #tpu.pipeline_mode<synchronous>, transform_indices = @transform_1, window_bounds = array<i64: 128, 128>}, {pipeline_mode = #tpu.pipeline_mode<synchronous>, transform_indices = @transform_2, window_bounds = array<i64: 128, 128>}, {pipeline_mode = #tpu.pipeline_mode<synchronous>, transform_indices = @transform_3, window_bounds = array<i64: 1, 128>}, {pipeline_mode = #tpu.pipeline_mode<synchronous>, transform_indices = @transform_4, window_bounds = array<i64: 16, 128>}]} {
    %c0 = arith.constant 0 : index
    %c0_0 = arith.constant 0 : index
    %0 = vector.load %arg1[%c0, %c0_0] : memref<16x128xf32, #tpu.memory_space<vmem>>, vector<16x128xf32>
    %c0_1 = arith.constant 0 : index
    %c0_2 = arith.constant 0 : index
    %1 = vector.load %arg2[%c0_1, %c0_2] : memref<128x128xf32, #tpu.memory_space<vmem>>, vector<128x128xf32>
    %cst = arith.constant dense<0.000000e+00> : vector<16x128xf32>
    %2 = tpu.matmul %0, %1, %cst {dimension_numbers = #tpu.dot_dimension_numbers<[1], [0], [0], [1], [0, 0, 1, 1], [], []>} : vector<16x128xf32>, vector<128x128xf32>, vector<16x128xf32> -> vector<16x128xf32>
    %c0_3 = arith.constant 0 : index
    %c0_4 = arith.constant 0 : index
    %3 = vector.load %arg3[%c0_3, %c0_4] : memref<128x128xf32, #tpu.memory_space<vmem>>, vector<128x128xf32>
    %cst_5 = arith.constant dense<0.000000e+00> : vector<16x128xf32>
    %4 = tpu.matmul %2, %3, %cst_5 {dimension_numbers = #tpu.dot_dimension_numbers<[1], [0], [0], [1], [0, 0, 1, 1], [], []>} : vector<16x128xf32>, vector<128x128xf32>, vector<16x128xf32> -> vector<16x128xf32>
    %c0_6 = arith.constant 0 : index
    %c0_7 = arith.constant 0 : index
    %5 = vector.load %arg4[%c0_6, %c0_7] : memref<1x128xf32, #tpu.memory_space<vmem>>, vector<1x128xf32>
    %6 = vector.broadcast %5 : vector<1x128xf32> to vector<16x128xf32>
    %7 = arith.addf %4, %6 : vector<16x128xf32>
    %cst_8 = arith.constant 0.000000e+00 : f32
    %8 = vector.broadcast %cst_8 : f32 to vector<16x128xf32>
    %9 = arith.maximumf %7, %8 : vector<16x128xf32>
    %c0_9 = arith.constant 0 : index
    %c0_10 = arith.constant 0 : index
    %10 = vector.load %arg5[%c0_9, %c0_10] : memref<16x128xf32, #tpu.memory_space<vmem>>, vector<16x128xf32>
    tpu.vector_store %arg5[%c0_9, %c0_10], %9 {strides = array<i32>} : memref<16x128xf32, #tpu.memory_space<vmem>>, vector<16x128xf32>,
    return
  }
  func.func @transform_0(%arg0: i32) -> (i32, i32) {
    %c0_i32 = arith.constant 0 : i32
    %c0_i32_0 = arith.constant 0 : i32
    %c0_i32_1 = arith.constant 0 : i32
    return %c0_i32, %c0_i32_0 : i32, i32
  }
  func.func @transform_1(%arg0: i32) -> (i32, i32) {
    %c0_i32 = arith.constant 0 : i32
    %c0_i32_0 = arith.constant 0 : i32
    %c0_i32_1 = arith.constant 0 : i32
    return %c0_i32, %c0_i32_0 : i32, i32
  }
  func.func @transform_2(%arg0: i32) -> (i32, i32) {
    %c0_i32 = arith.constant 0 : i32
    %c0_i32_0 = arith.constant 0 : i32
    %c0_i32_1 = arith.constant 0 : i32
    return %c0_i32, %c0_i32_0 : i32, i32
  }
  func.func @transform_3(%arg0: i32) -> (i32, i32) {
    %c0_i32 = arith.constant 0 : i32
    %c0_i32_0 = arith.constant 0 : i32
    %c0_i32_1 = arith.constant 0 : i32
    return %c0_i32, %c0_i32_0 : i32, i32
  }
  func.func @transform_4(%arg0: i32) -> (i32, i32) {
    %c0_i32 = arith.constant 0 : i32
    %c0_i32_0 = arith.constant 0 : i32
    %c0_i32_1 = arith.constant 0 : i32
    return %c0_i32, %c0_i32_0 : i32, i32
  }
}

</mosaic_0001>

<llo_original>
// kernel: tpu_custom_call.1
$region0: #{tpu_custom_call.1}
  #allocation0 [shape = 'u32[]', space=smem, size = 0x4, offset = 0x4, fixed_abs, tag = 'smem constant byte address 0x4 - core index']
  #allocation1 [shape = 'u32[144,128]{1,0:T(1,128)}', space=vmem, size = 0x12000, scoped, tag = 'internal scratch']
  %s0 = inlined_call_operand.hbm [shape: f32[16,128], index: 0, kind: input, shape index: {}]
  %s1 = inlined_call_operand.hbm [shape: f32[128,128], index: 1, kind: input, shape index: {}]
  %s2 = inlined_call_operand.hbm [shape: f32[128,128], index: 2, kind: input, shape index: {}]
  %s3 = inlined_call_operand.vmem [shape: f32[1,128], index: 3, kind: input, shape index: {}]
  %s4 = inlined_call_operand.hbm [shape: f32[16,128], index: 4, kind: output, shape index: {}]
  %s5 = sld [smem:[#allocation0]]
  $region38: #{tpu_custom_call.1} parent=0
    _
  %s7 = ssub.s32 1, %s5
  %s8 = scalar_select 0, %s7, %s5
  $region1: #{tpu_custom_call.1} parent=0
    #allocation2 [shape = 'u8[8192]{0}', space=vmem, size = 0x2000, scoped, tag = 'input window, operand 0, single buffered']
    #allocation3 [shape = 's32[1]{0}', space=sflag, size = 0x4, scoped, tag = 'scoped memory for tpu_custom_call.1']
    #allocation4 [shape = 's32[1]{0}', space=sflag, size = 0x4, scoped, tag = 'scoped memory for tpu_custom_call.1']
    #allocation5 [shape = 'u8[65536]{0}', space=vmem, size = 0x10000, scoped, tag = 'input window, operand 1, single buffered']
    #allocation6 [shape = 's32[1]{0}', space=sflag, size = 0x4, scoped, tag = 'scoped memory for tpu_custom_call.1']
    #allocation7 [shape = 'u8[65536]{0}', space=vmem, size = 0x10000, scoped, tag = 'input window, operand 2, single buffered']
    #allocation8 [shape = 'u8[8192]{0}', space=vmem, size = 0x2000, scoped, tag = 'output window, operand 0, single buffered']
    %9 = vsyncpa [#allocation3], 0
    %10 = vsyncpa [#allocation6], 0
    %11 = vsyncpa [#allocation4], 0
    // Predicated region
    $region2: #{tpu_custom_call.1} parent=1 // pred_check
      _
    $region3: #{tpu_custom_call.1} parent=1 // pred_check_branch
      %13 = sbr.rel (0) target = $region5
    $region4: #{tpu_custom_call.1} parent=1 // pred_region
      %s15 = ssub.s32 256, 256
      %16 = vsyncadd [#allocation3], %s15
      %s17 = sshll.u32 [#allocation2], 4
      %s18 = int_to_ptr.vmem [resolvable:$true] %s17
      %23 = dma.hbm_to_vmem [thread:$0]  %s0, 256, %s18, [#allocation3], 128, 128, 8
    $region5: #{tpu_custom_call.1} parent=1 // pred_fallthru
      _
    // Predicated region
    $region6: #{tpu_custom_call.1} parent=1 // pred_check
      _
    $region7: #{tpu_custom_call.1} parent=1 // pred_check_branch
      %25 = sbr.rel (0) target = $region9
    $region8: #{tpu_custom_call.1} parent=1 // pred_region
      %s27 = ssub.s32 2048, 2048
      %28 = vsyncadd [#allocation6], %s27
      %s29 = sshll.u32 [#allocation5], 4
      %s30 = int_to_ptr.vmem [resolvable:$true] %s29
      %35 = dma.hbm_to_vmem [thread:$0]  %s1, 2048, %s30, [#allocation6], 128, 128, 8
    $region9: #{tpu_custom_call.1} parent=1 // pred_fallthru
      _
    // Predicated region
    $region10: #{tpu_custom_call.1} parent=1 // pred_check
      _
    $region11: #{tpu_custom_call.1} parent=1 // pred_check_branch
      %37 = sbr.rel (0) target = $region13
    $region12: #{tpu_custom_call.1} parent=1 // pred_region
      %s39 = ssub.s32 2048, 2048
      %40 = vsyncadd [#allocation6], %s39
      %s41 = sshll.u32 [#allocation7], 4
      %s42 = int_to_ptr.vmem [resolvable:$true] %s41
      %47 = dma.hbm_to_vmem [thread:$0]  %s2, 2048, %s42, [#allocation6], 128, 128, 8
    $region13: #{tpu_custom_call.1} parent=1 // pred_fallthru
      _
    // Predicated region
    $region14: #{tpu_custom_call.1} parent=1 // pred_check
      _
    $region15: #{tpu_custom_call.1} parent=1 // pred_check_branch
      %49 = sbr.rel (0) target = $region17
    $region16: #{tpu_custom_call.1} parent=1 // pred_region
      _
    $region17: #{tpu_custom_call.1} parent=1 // pred_fallthru
      _
    // Predicated region
    $region18: #{tpu_custom_call.1} parent=1 // pred_check
      _
    $region19: #{tpu_custom_call.1} parent=1 // pred_check_branch
      %51 = sbr.rel (0) target = $region21
    $region20: #{tpu_custom_call.1} parent=1 // pred_region
      %52 = dma.done [#allocation3], 256
    $region21: #{tpu_custom_call.1} parent=1 // pred_fallthru
      _
    // Predicated region
    $region22: #{tpu_custom_call.1} parent=1 // pred_check
      _
    $region23: #{tpu_custom_call.1} parent=1 // pred_check_branch
      %54 = sbr.rel (0) target = $region25
    $region24: #{tpu_custom_call.1} parent=1 // pred_region
      %55 = dma.done [#allocation6], 2048
    $region25: #{tpu_custom_call.1} parent=1 // pred_fallthru
      _
    // Predicated region
    $region26: #{tpu_custom_call.1} parent=1 // pred_check
      _
    $region27: #{tpu_custom_call.1} parent=1 // pred_check_branch
      %57 = sbr.rel (0) target = $region29
    $region28: #{tpu_custom_call.1} parent=1 // pred_region
      %58 = dma.done [#allocation6], 2048
    $region29: #{tpu_custom_call.1} parent=1 // pred_fallthru
      _
    %v59 = vld [vmem:[#allocation2] sm:$0xff]
    %v60 = vld [vmem:[#allocation2 + $0x8] sm:$0xff]
    %v61 = vld [vmem:[#allocation5] sm:$0xff]
    %v62 = vld [vmem:[#allocation5 + $0x8] sm:$0xff]
    %v63 = vld [vmem:[#allocation5 + $0x10] sm:$0xff]
    %v64 = vld [vmem:[#allocation5 + $0x18] sm:$0xff]
    %v65 = vld [vmem:[#allocation5 + $0x20] sm:$0xff]
    %v66 = vld [vmem:[#allocation5 + $0x28] sm:$0xff]
    %v67 = vld [vmem:[#allocation5 + $0x30] sm:$0xff]
    %v68 = vld [vmem:[#allocation5 + $0x38] sm:$0xff]
    %v69 = vld [vmem:[#allocation5 + $0x40] sm:$0xff]
    %v70 = vld [vmem:[#allocation5 + $0x48] sm:$0xff]
    %v71 = vld [vmem:[#allocation5 + $0x50] sm:$0xff]
    %v72 = vld [vmem:[#allocation5 + $0x58] sm:$0xff]
    %v73 = vld [vmem:[#allocation5 + $0x60] sm:$0xff]
    %v74 = vld [vmem:[#allocation5 + $0x68] sm:$0xff]
    %v75 = vld [vmem:[#allocation5 + $0x70] sm:$0xff]
    %v76 = vld [vmem:[#allocation5 + $0x78] sm:$0xff]
    %77 = vmatprep.subr.mxu0 0.0
    %78 = vmatpush1.msra.mxu0 %v61
    %79 = vmatprep.subr.mxu0 0.0
    %80 = vmatpush1.msra.mxu0 %v62
    %81 = vmatprep.subr.mxu0 0.0
    %82 = vmatpush1.msra.mxu0 %v63
    %83 = vmatprep.subr.mxu0 0.0
    %84 = vmatpush1.msra.mxu0 %v64
    %85 = vmatprep.subr.mxu0 0.0
    %86 = vmatpush1.msra.mxu0 %v65
    %87 = vmatprep.subr.mxu0 0.0
    %88 = vmatpush1.msra.mxu0 %v66
    %89 = vmatprep.subr.mxu0 0.0
    %90 = vmatpush1.msra.mxu0 %v67
    %91 = vmatprep.subr.mxu0 0.0
    %92 = vmatpush1.msra.mxu0 %v68
    %93 = vmatprep.subr.mxu0 0.0
    %94 = vmatpush1.msra.mxu0 %v69
    %95 = vmatprep.subr.mxu0 0.0
    %96 = vmatpush1.msra.mxu0 %v70
    %97 = vmatprep.subr.mxu0 0.0
    %98 = vmatpush1.msra.mxu0 %v71
    %99 = vmatprep.subr.mxu0 0.0
    %100 = vmatpush1.msra.mxu0 %v72
    %101 = vmatprep.subr.mxu0 0.0
    %102 = vmatpush1.msra.mxu0 %v73
    %103 = vmatprep.subr.mxu0 0.0
    %104 = vmatpush1.msra.mxu0 %v74
    %105 = vmatprep.subr.mxu0 0.0
    %106 = vmatpush1.msra.mxu0 %v75
    %107 = vmatprep.subr.mxu0 0.0
    %108 = vmatpush1.msra.mxu0 %v76
    %109 = vmatprep.subr.mxu0 0.0
    %110 = vmatpush1.msra.mxu0 0.0
    %111 = vmatprep.subr.mxu0 0.0
    %112 = vmatpush1.msra.mxu0 0.0
    %113 = vmatprep.subr.mxu0 0.0
    %114 = vmatpush1.msra.mxu0 0.0
    %115 = vmatprep.subr.mxu0 0.0
    %116 = vmatpush1.msra.mxu0 0.0
    %117 = vmatprep.subr.mxu0 0.0
    %118 = vmatpush1.msra.mxu0 0.0
    %119 = vmatprep.subr.mxu0 0.0
    %120 = vmatpush1.msra.mxu0 0.0
    %121 = vmatprep.subr.mxu0 0.0
    %122 = vmatpush1.msra.mxu0 0.0
    %123 = vmatprep.subr.mxu0 0.0
    %124 = vmatpush1.msra.mxu0 0.0
    %125 = vmatprep.subr.mxu0 0.0
    %126 = vmatpush1.msra.mxu0 0.0
    %127 = vmatprep.subr.mxu0 0.0
    %128 = vmatpush1.msra.mxu0 0.0
    %129 = vmatprep.subr.mxu0 0.0
    %130 = vmatpush1.msra.mxu0 0.0
    %131 = vmatprep.subr.mxu0 0.0
    %132 = vmatpush1.msra.mxu0 0.0
    %133 = vmatprep.subr.mxu0 0.0
    %134 = vmatpush1.msra.mxu0 0.0
    %135 = vmatprep.subr.mxu0 0.0
    %136 = vmatpush1.msra.mxu0 0.0
    %137 = vmatprep.subr.mxu0 0.0
    %138 = vmatpush1.msra.mxu0 0.0
    %139 = vmatprep.subr.mxu0 0.0
    %140 = vmatpush1.msra.mxu0 0.0
    %141 = vmatprep.mubr.f32.mxu0 0.0
    %142 = vmatmul.mubr.f32.gmra.mrb[0].mxu0 %v59
    %v143 = vpop.f32.mrb[0].mxu0
    %v144 = vadd.f32 0.0, %v143
    %v145 = vpop.f32.mrb[0].mxu0
    %146 = vmatprep.mubr.f32.mxu0 0.0
    %147 = vmatmul.mubr.f32.gmra.mrb[0].mxu0 %v60
    %v148 = vpop.f32.mrb[0].mxu0
    %v149 = vadd.f32 0.0, %v148
    %v150 = vpop.f32.mrb[0].mxu0
    %151 = vdwg.mxu0
    %v152 = vld [vmem:[#allocation7] sm:$0xff]
    %v153 = vld [vmem:[#allocation7 + $0x8] sm:$0xff]
    %v154 = vld [vmem:[#allocation7 + $0x10] sm:$0xff]
    %v155 = vld [vmem:[#allocation7 + $0x18] sm:$0xff]
    %v156 = vld [vmem:[#allocation7 + $0x20] sm:$0xff]
    %v157 = vld [vmem:[#allocation7 + $0x28] sm:$0xff]
    %v158 = vld [vmem:[#allocation7 + $0x30] sm:$0xff]
    %v159 = vld [vmem:[#allocation7 + $0x38] sm:$0xff]
    %v160 = vld [vmem:[#allocation7 + $0x40] sm:$0xff]
    %v161 = vld [vmem:[#allocation7 + $0x48] sm:$0xff]
    %v162 = vld [vmem:[#allocation7 + $0x50] sm:$0xff]
    %v163 = vld [vmem:[#allocation7 + $0x58] sm:$0xff]
    %v164 = vld [vmem:[#allocation7 + $0x60] sm:$0xff]
    %v165 = vld [vmem:[#allocation7 + $0x68] sm:$0xff]
    %v166 = vld [vmem:[#allocation7 + $0x70] sm:$0xff]
    %v167 = vld [vmem:[#allocation7 + $0x78] sm:$0xff]
    %v168 = vld [vmem:[%s3] sm:$0x1]
    %v170 = vlaneseq
    %v171 = vshrl.u32 %v170, 7
    %v172 = vsub.s32 0, %v171
    %v173 = vrot.slane %v168, %v172
    %175 = vmatprep.subr.mxu0 0.0
    %176 = vmatpush1.msra.mxu0 %v152
    %177 = vmatprep.subr.mxu0 0.0
    %178 = vmatpush1.msra.mxu0 %v153
    %179 = vmatprep.subr.mxu0 0.0
    %180 = vmatpush1.msra.mxu0 %v154
    %181 = vmatprep.subr.mxu0 0.0
    %182 = vmatpush1.msra.mxu0 %v155
    %183 = vmatprep.subr.mxu0 0.0
    %184 = vmatpush1.msra.mxu0 %v156
    %185 = vmatprep.subr.mxu0 0.0
    %186 = vmatpush1.msra.mxu0 %v157
    %187 = vmatprep.subr.mxu0 0.0
    %188 = vmatpush1.msra.mxu0 %v158
    %189 = vmatprep.subr.mxu0 0.0
    %190 = vmatpush1.msra.mxu0 %v159
    %191 = vmatprep.subr.mxu0 0.0
    %192 = vmatpush1.msra.mxu0 %v160
    %193 = vmatprep.subr.mxu0 0.0
    %194 = vmatpush1.msra.mxu0 %v161
    %195 = vmatprep.subr.mxu0 0.0
    %196 = vmatpush1.msra.mxu0 %v162
    %197 = vmatprep.subr.mxu0 0.0
    %198 = vmatpush1.msra.mxu0 %v163
    %199 = vmatprep.subr.mxu0 0.0
    %200 = vmatpush1.msra.mxu0 %v164
    %201 = vmatprep.subr.mxu0 0.0
    %202 = vmatpush1.msra.mxu0 %v165
    %203 = vmatprep.subr.mxu0 0.0
    %204 = vmatpush1.msra.mxu0 %v166
    %205 = vmatprep.subr.mxu0 0.0
    %206 = vmatpush1.msra.mxu0 %v167
    %207 = vmatprep.subr.mxu0 0.0
    %208 = vmatpush1.msra.mxu0 0.0
    %209 = vmatprep.subr.mxu0 0.0
    %210 = vmatpush1.msra.mxu0 0.0
    %211 = vmatprep.subr.mxu0 0.0
    %212 = vmatpush1.msra.mxu0 0.0
    %213 = vmatprep.subr.mxu0 0.0
    %214 = vmatpush1.msra.mxu0 0.0
    %215 = vmatprep.subr.mxu0 0.0
    %216 = vmatpush1.msra.mxu0 0.0
    %217 = vmatprep.subr.mxu0 0.0
    %218 = vmatpush1.msra.mxu0 0.0
    %219 = vmatprep.subr.mxu0 0.0
    %220 = vmatpush1.msra.mxu0 0.0
    %221 = vmatprep.subr.mxu0 0.0
    %222 = vmatpush1.msra.mxu0 0.0
    %223 = vmatprep.subr.mxu0 0.0
    %224 = vmatpush1.msra.mxu0 0.0
    %225 = vmatprep.subr.mxu0 0.0
    %226 = vmatpush1.msra.mxu0 0.0
    %227 = vmatprep.subr.mxu0 0.0
    %228 = vmatpush1.msra.mxu0 0.0
    %229 = vmatprep.subr.mxu0 0.0
    %230 = vmatpush1.msra.mxu0 0.0
    %231 = vmatprep.subr.mxu0 0.0
    %232 = vmatpush1.msra.mxu0 0.0
    %233 = vmatprep.subr.mxu0 0.0
    %234 = vmatpush1.msra.mxu0 0.0
    %235 = vmatprep.subr.mxu0 0.0
    %236 = vmatpush1.msra.mxu0 0.0
    %237 = vmatprep.subr.mxu0 0.0
    %238 = vmatpush1.msra.mxu0 0.0
    %239 = vmatprep.mubr.f32.mxu0 0.0
    %240 = vmatmul.mubr.f32.gmra.mrb[0].mxu0 %v144
    %v241 = vpop.f32.mrb[0].mxu0
    %v242 = vadd.f32 %v173, %v241
    %v243 = vpop.f32.mrb[0].mxu0
    %244 = vmatprep.mubr.f32.mxu0 0.0
    %245 = vmatmul.mubr.f32.gmra.mrb[0].mxu0 %v149
    %v246 = vpop.f32.mrb[0].mxu0
    %v247 = vadd.f32 %v173, %v246
    %v248 = vpop.f32.mrb[0].mxu0
    %249 = vdwg.mxu0
    %v250 = vmax.f32 %v242, 0.0
    %v251 = vmax.f32 %v247, 0.0
    %252 = vst [vmem:[#allocation8] sm:$0xff] %v250
    %253 = vst [vmem:[#allocation8 + $0x8] sm:$0xff] %v251
    // Predicated region
    $region30: #{tpu_custom_call.1} parent=1 // pred_check
      _
    $region31: #{tpu_custom_call.1} parent=1 // pred_check_branch
      %255 = sbr.rel (0) target = $region33
    $region32: #{tpu_custom_call.1} parent=1 // pred_region
      %s257 = ssub.s32 256, 256
      %258 = vsyncadd [#allocation4], %s257
      %s259 = sshll.u32 [#allocation8], 4
      %s260 = int_to_ptr.vmem [resolvable:$true] %s259
      %265 = dma.vmem_to_hbm [thread:$0]  %s260, 256, %s4, [#allocation4], 128, 128, 8
    $region33: #{tpu_custom_call.1} parent=1 // pred_fallthru
      _
    // Predicated region
    $region34: #{tpu_custom_call.1} parent=1 // pred_check
      _
    $region35: #{tpu_custom_call.1} parent=1 // pred_check_branch
      %267 = sbr.rel (0) target = $region37
    $region36: #{tpu_custom_call.1} parent=1 // pred_region
      %268 = dma.done [#allocation4], 256
    $region37: #{tpu_custom_call.1} parent=1 // pred_fallthru
      _
    %269 = vsyncpa [#allocation3], 1
    %270 = vsyncpa [#allocation6], 1
    %271 = vsyncpa [#allocation4], 1

</llo_original>
